<compile_context>
chip_gen: v5e
topology: v5e:2x2
jax: 0.10.0
libtpu: 0.0.40
codegen_flags: <defaults>
</compile_context>

<pallas_src>
import jax
import jax.numpy as jnp
from jax.experimental import pallas as pl
from jax.experimental.pallas import tpu as pltpu


STATE_SPACE = 8
ACTION_SPACE = 4
HIDDEN = 64
BATCH = 16           # small example batch; kernel handles any batch size

LANES = 128          # lane width of the packed parameter slab / packed output

# ---- packed-parameter slab row layout (all section starts 8-row aligned) ----
ROW_W1 = 0                       # 8 rows   : [w1a | w1c]            (8, 128)
ROW_B1 = 8                       # 1 row    : [b1a | b1c]
ROW_W2 = 16                      # 128 rows : blockdiag(w2a, w2c)    (128, 128)
ROW_B2 = 144                     # 1 row    : [b2a | b2c]
ROW_W3 = 152                     # 128 rows : actor->lanes 0:4, critic->lane 4
ROW_B3 = 280                     # 1 row    : [b3a(0:4) | b3c(4)]
ROW_SIG = 288                    # 1 row    : sigma params in lanes 5:9
N_ROWS = 296

# ---- packed-output lane layout ----
MEAN_LANE = 0                    # lanes 0:4  -> action_mean
VALUE_LANE = ACTION_SPACE        # lane  4    -> state_value
SIG_LANE = ACTION_SPACE + 1      # lanes 5:9  -> softplus(sigma)


def policy_kernel(x_ref, p_ref, out_ref):
    x = x_ref[...]                                          # (B, STATE_SPACE)

    # ---- fused layer 1: tanh(x @ [w1a|w1c] + [b1a|b1c]) --------------------
    w1 = p_ref[pl.ds(ROW_W1, STATE_SPACE), :]               # (8, 128)
    b1 = p_ref[pl.ds(ROW_B1, 1), :]                         # (1, 128)
    h = jnp.tanh(jnp.dot(x, w1, preferred_element_type=jnp.float32) + b1)

    # ---- fused layer 2: tanh(h @ blockdiag(w2a, w2c) + [b2a|b2c]) ----------
    w2 = p_ref[pl.ds(ROW_W2, 2 * HIDDEN), :]                # (128, 128)
    b2 = p_ref[pl.ds(ROW_B2, 1), :]                         # (1, 128)
    h = jnp.tanh(jnp.dot(h, w2, preferred_element_type=jnp.float32) + b2)

    # ---- fused layer 3: mean -> lanes 0:4, value -> lane 4 -----------------
    w3 = p_ref[pl.ds(ROW_W3, 2 * HIDDEN), :]                # (128, 128)
    b3 = p_ref[pl.ds(ROW_B3, 1), :]                         # (1, 128)
    y = jnp.dot(h, w3, preferred_element_type=jnp.float32) + b3   # (B, 128)

    # ---- stable softplus(sigma), merged into lanes 5:9 of the output -------
    sig = p_ref[pl.ds(ROW_SIG, 1), :]                       # (1, 128)
    sp = jnp.maximum(sig, 0.0) + jnp.log1p(jnp.exp(-jnp.abs(sig)))

    lane = jax.lax.broadcasted_iota(jnp.int32, out_ref.shape, 1)
    is_sigma_lane = (lane >= SIG_LANE) & (lane < SIG_LANE + ACTION_SPACE)
    out_ref[...] = jnp.where(is_sigma_lane, sp, y)


def policy_forward(x, param_slab):
    """Returns (action_mean [B,A], sigma [A], state_value [B,1])."""
    B = x.shape[0]
    packed = pl.pallas_call(
        policy_kernel,
        out_shape=jax.ShapeDtypeStruct((B, LANES), jnp.float32),
        in_specs=[
            pl.BlockSpec(memory_space=pltpu.MemorySpace.VMEM),   # x
            pl.BlockSpec(memory_space=pltpu.MemorySpace.VMEM),   # param slab
        ],
        out_specs=pl.BlockSpec(memory_space=pltpu.MemorySpace.VMEM),
    )(x, param_slab)
    mean = packed[:, MEAN_LANE:MEAN_LANE + ACTION_SPACE]
    value = packed[:, VALUE_LANE:VALUE_LANE + 1]
    sigma = packed[0, SIG_LANE:SIG_LANE + ACTION_SPACE]
    return mean, sigma, value


def init_params(key):
    """Match Policy.init_weights(): weight ~ N(0,1), bias = 0, sigma = 0.5.
    Weights are stored transposed ([in, out]) relative to torch's [out, in]."""
    ks = jax.random.split(key, 6)

    def lin(k, n_in, n_out):
        w = jax.random.normal(k, (n_in, n_out), dtype=jnp.float32)
        b = jnp.zeros((1, n_out), dtype=jnp.float32)
        return w, b

    w1a, b1a = lin(ks[0], STATE_SPACE, HIDDEN)
    w2a, b2a = lin(ks[1], HIDDEN, HIDDEN)
    w3a, b3a = lin(ks[2], HIDDEN, ACTION_SPACE)
    w1c, b1c = lin(ks[3], STATE_SPACE, HIDDEN)
    w2c, b2c = lin(ks[4], HIDDEN, HIDDEN)
    w3c, b3c = lin(ks[5], HIDDEN, 1)
    sigma = jnp.full((1, ACTION_SPACE), 0.5, dtype=jnp.float32)
    return dict(w1a=w1a, b1a=b1a, w2a=w2a, b2a=b2a, w3a=w3a, b3a=b3a,
                sigma=sigma,
                w1c=w1c, b1c=b1c, w2c=w2c, b2c=b2c, w3c=w3c, b3c=b3c)


def pack_params(p):
    """Build the single lane-dense (N_ROWS, 128) parameter slab. Done ONCE
    on the host, not per forward call."""
    slab = jnp.zeros((N_ROWS, LANES), dtype=jnp.float32)
    # layer 1: columns 0:64 actor, 64:128 critic
    slab = slab.at[ROW_W1:ROW_W1 + STATE_SPACE, 0:HIDDEN].set(p["w1a"])
    slab = slab.at[ROW_W1:ROW_W1 + STATE_SPACE, HIDDEN:2 * HIDDEN].set(p["w1c"])
    slab = slab.at[ROW_B1, 0:HIDDEN].set(p["b1a"].reshape(-1))
    slab = slab.at[ROW_B1, HIDDEN:2 * HIDDEN].set(p["b1c"].reshape(-1))
    # layer 2: block-diagonal
    slab = slab.at[ROW_W2:ROW_W2 + HIDDEN, 0:HIDDEN].set(p["w2a"])
    slab = slab.at[ROW_W2 + HIDDEN:ROW_W2 + 2 * HIDDEN, HIDDEN:2 * HIDDEN].set(p["w2c"])
    slab = slab.at[ROW_B2, 0:HIDDEN].set(p["b2a"].reshape(-1))
    slab = slab.at[ROW_B2, HIDDEN:2 * HIDDEN].set(p["b2c"].reshape(-1))
    # layer 3: actor half -> lanes 0:4 (mean), critic half -> lane 4 (value)
    slab = slab.at[ROW_W3:ROW_W3 + HIDDEN, 0:ACTION_SPACE].set(p["w3a"])
    slab = slab.at[ROW_W3 + HIDDEN:ROW_W3 + 2 * HIDDEN,
                   VALUE_LANE:VALUE_LANE + 1].set(p["w3c"])
    slab = slab.at[ROW_B3, 0:ACTION_SPACE].set(p["b3a"].reshape(-1))
    slab = slab.at[ROW_B3, VALUE_LANE:VALUE_LANE + 1].set(p["b3c"].reshape(-1))
    # sigma parameters live directly in the output sigma lanes
    slab = slab.at[ROW_SIG, SIG_LANE:SIG_LANE + ACTION_SPACE].set(p["sigma"].reshape(-1))
    return slab


def policy_forward_ref(x, params):
    """Pure-JAX reference (unfused, full-f32 matmuls) for correctness check."""
    hi = jax.lax.Precision.HIGHEST

    def dot(a, b):
        return jnp.dot(a, b, precision=hi)

    h = jnp.tanh(dot(x, params["w1a"]) + params["b1a"])
    h = jnp.tanh(dot(h, params["w2a"]) + params["b2a"])
    mean = dot(h, params["w3a"]) + params["b3a"]
    sigma = jax.nn.softplus(params["sigma"]).reshape(ACTION_SPACE)
    c = jnp.tanh(dot(x, params["w1c"]) + params["b1c"])
    c = jnp.tanh(dot(c, params["w2c"]) + params["b2c"])
    value = dot(c, params["w3c"]) + params["b3c"]
    return mean, sigma, value


if __name__ == "__main__":
    key = jax.random.PRNGKey(0)
    k_param, k_x = jax.random.split(key)
    params = init_params(k_param)
    param_slab = pack_params(params)                     # packed once, on host
    x = jax.random.normal(k_x, (BATCH, STATE_SPACE), dtype=jnp.float32)

    mean, sigma, value = policy_forward(x, param_slab)
    jax.block_until_ready((mean, sigma, value))

    # sanity check against pure-JAX reference
    mean_r, sigma_r, value_r = policy_forward_ref(x, params)
    assert mean.shape == (BATCH, ACTION_SPACE)
    assert sigma.shape == (ACTION_SPACE,)
    assert value.shape == (BATCH, 1)
    assert jnp.allclose(mean, mean_r, atol=2e-3, rtol=2e-3), \
        float(jnp.max(jnp.abs(mean - mean_r)))
    assert jnp.allclose(sigma, sigma_r, atol=1e-5, rtol=1e-5)
    assert jnp.allclose(value, value_r, atol=2e-3, rtol=2e-3), \
        float(jnp.max(jnp.abs(value - value_r)))

    print("KERNEL_OK")
</pallas_src>

<mosaic_0001>
module attributes {stable_mosaic.version = 11 : i64} {
  func.func @policy_kernel(%arg0: memref<16x8xf32, #tpu.memory_space<vmem>>, %arg1: memref<296x128xf32, #tpu.memory_space<vmem>>, %arg2: memref<16x128xf32, #tpu.memory_space<vmem>>) attributes {dimension_semantics = [], scalar_prefetch = 0 : i64, scratch_operands = 0 : i64, tpu.core_type = #tpu.core_type<tc>} {
    %c0 = arith.constant 0 : index
    %c0_0 = arith.constant 0 : index
    %0 = vector.load %arg0[%c0, %c0_0] : memref<16x8xf32, #tpu.memory_space<vmem>>, vector<16x8xf32>
    %c0_1 = arith.constant 0 : index
    %c0_2 = arith.constant 0 : index
    %1 = vector.load %arg1[%c0_1, %c0_2] : memref<296x128xf32, #tpu.memory_space<vmem>>, vector<8x128xf32>
    %c8 = arith.constant 8 : index
    %c0_3 = arith.constant 0 : index
    %2 = vector.load %arg1[%c8, %c0_3] : memref<296x128xf32, #tpu.memory_space<vmem>>, vector<1x128xf32>
    %cst = arith.constant dense<0.000000e+00> : vector<16x128xf32>
    %3 = tpu.matmul %0, %1, %cst {dimension_numbers = #tpu.dot_dimension_numbers<[1], [0], [0], [1], [0, 0, 1, 1], [], []>} : vector<16x8xf32>, vector<8x128xf32>, vector<16x128xf32> -> vector<16x128xf32>
    %4 = vector.broadcast %2 : vector<1x128xf32> to vector<16x128xf32>
    %5 = arith.addf %3, %4 : vector<16x128xf32>
    %6 = math.tanh %5 : vector<16x128xf32>
    %c16 = arith.constant 16 : index
    %c0_4 = arith.constant 0 : index
    %7 = vector.load %arg1[%c16, %c0_4] : memref<296x128xf32, #tpu.memory_space<vmem>>, vector<128x128xf32>
    %c144 = arith.constant 144 : index
    %c0_5 = arith.constant 0 : index
    %8 = vector.load %arg1[%c144, %c0_5] : memref<296x128xf32, #tpu.memory_space<vmem>>, vector<1x128xf32>
    %cst_6 = arith.constant dense<0.000000e+00> : vector<16x128xf32>
    %9 = tpu.matmul %6, %7, %cst_6 {dimension_numbers = #tpu.dot_dimension_numbers<[1], [0], [0], [1], [0, 0, 1, 1], [], []>} : vector<16x128xf32>, vector<128x128xf32>, vector<16x128xf32> -> vector<16x128xf32>
    %10 = vector.broadcast %8 : vector<1x128xf32> to vector<16x128xf32>
    %11 = arith.addf %9, %10 : vector<16x128xf32>
    %12 = math.tanh %11 : vector<16x128xf32>
    %c152 = arith.constant 152 : index
    %c0_7 = arith.constant 0 : index
    %13 = vector.load %arg1[%c152, %c0_7] : memref<296x128xf32, #tpu.memory_space<vmem>>, vector<128x128xf32>
    %c280 = arith.constant 280 : index
    %c0_8 = arith.constant 0 : index
    %14 = vector.load %arg1[%c280, %c0_8] : memref<296x128xf32, #tpu.memory_space<vmem>>, vector<1x128xf32>
    %cst_9 = arith.constant dense<0.000000e+00> : vector<16x128xf32>
    %15 = tpu.matmul %12, %13, %cst_9 {dimension_numbers = #tpu.dot_dimension_numbers<[1], [0], [0], [1], [0, 0, 1, 1], [], []>} : vector<16x128xf32>, vector<128x128xf32>, vector<16x128xf32> -> vector<16x128xf32>
    %16 = vector.broadcast %14 : vector<1x128xf32> to vector<16x128xf32>
    %17 = arith.addf %15, %16 : vector<16x128xf32>
    %c288 = arith.constant 288 : index
    %c0_10 = arith.constant 0 : index
    %18 = vector.load %arg1[%c288, %c0_10] : memref<296x128xf32, #tpu.memory_space<vmem>>, vector<1x128xf32>
    %cst_11 = arith.constant 0.000000e+00 : f32
    %19 = vector.broadcast %cst_11 : f32 to vector<1x128xf32>
    %20 = arith.maximumf %18, %19 : vector<1x128xf32>
    %21 = math.absf %18 : vector<1x128xf32>
    %cst_12 = arith.constant 0.000000e+00 : f32
    %22 = vector.broadcast %cst_12 : f32 to vector<1x128xf32>
    %23 = arith.subf %22, %21 : vector<1x128xf32>
    %24 = math.exp %23 : vector<1x128xf32>
    %25 = math.log1p %24 : vector<1x128xf32>
    %26 = arith.addf %20, %25 : vector<1x128xf32>
    %27 = tpu.iota {dimensions = array<i32: 1>} : vector<16x128xi32>
    %c5_i32 = arith.constant 5 : i32
    %28 = vector.broadcast %c5_i32 : i32 to vector<16x128xi32>
    %29 = arith.cmpi sge, %27, %28 : vector<16x128xi32>
    %c9_i32 = arith.constant 9 : i32
    %30 = vector.broadcast %c9_i32 : i32 to vector<16x128xi32>
    %31 = arith.cmpi slt, %27, %30 : vector<16x128xi32>
    %32 = arith.andi %29, %31 : vector<16x128xi1>
    %33 = vector.shape_cast %26 : vector<1x128xf32> to vector<1x128xf32>
    %34 = vector.broadcast %33 : vector<1x128xf32> to vector<16x128xf32>
    %35 = arith.select %32, %34, %17 : vector<16x128xi1>, vector<16x128xf32>
    %c0_13 = arith.constant 0 : index
    %c0_14 = arith.constant 0 : index
    %36 = vector.load %arg2[%c0_13, %c0_14] : memref<16x128xf32, #tpu.memory_space<vmem>>, vector<16x128xf32>
    tpu.vector_store %arg2[%c0_13, %c0_14], %35 {strides = array<i32>} : memref<16x128xf32, #tpu.memory_space<vmem>>, vector<16x128xf32>,
    return
  }
}

</mosaic_0001>

<llo_original>
// kernel: tpu_custom_call.1
$region0: #{tpu_custom_call.1}
  #allocation0 [shape = 'u32[]', space=smem, size = 0x4, offset = 0x4, fixed_abs, tag = 'smem constant byte address 0x4 - core index']
  #allocation1 [shape = 'u32[72,128]{1,0:T(1,128)}', space=vmem, size = 0x9000, scoped, tag = 'internal scratch']
  %s0 = inlined_call_operand.vmem [shape: f32[16,8], index: 0, kind: input, shape index: {}]
  %s1 = inlined_call_operand.hbm [shape: f32[296,128], index: 1, kind: input, shape index: {}]
  %s2 = inlined_call_operand.hbm [shape: f32[16,128], index: 2, kind: output, shape index: {}]
  %s3 = sld [smem:[#allocation0]]
  $region22: #{tpu_custom_call.1} parent=0
    _
  %s5 = ssub.s32 1, %s3
  %s6 = scalar_select 0, %s5, %s3
  $region1: #{tpu_custom_call.1} parent=0
    #allocation2 [shape = 'u8[151552]{0}', space=vmem, size = 0x25000, scoped, tag = 'input window, operand 1, single buffered']
    #allocation3 [shape = 's32[1]{0}', space=sflag, size = 0x4, scoped, tag = 'scoped memory for tpu_custom_call.1']
    #allocation4 [shape = 's32[1]{0}', space=sflag, size = 0x4, scoped, tag = 'scoped memory for tpu_custom_call.1']
    #allocation5 [shape = 'u8[8192]{0}', space=vmem, size = 0x2000, scoped, tag = 'output window, operand 0, single buffered']
    %7 = vsyncpa [#allocation3], 0
    %8 = vsyncpa [#allocation4], 0
    // Predicated region
    $region2: #{tpu_custom_call.1} parent=1 // pred_check
      _
    $region3: #{tpu_custom_call.1} parent=1 // pred_check_branch
      %10 = sbr.rel (0) target = $region5
    $region4: #{tpu_custom_call.1} parent=1 // pred_region
      _
    $region5: #{tpu_custom_call.1} parent=1 // pred_fallthru
      _
    // Predicated region
    $region6: #{tpu_custom_call.1} parent=1 // pred_check
      _
    $region7: #{tpu_custom_call.1} parent=1 // pred_check_branch
      %12 = sbr.rel (0) target = $region9
    $region8: #{tpu_custom_call.1} parent=1 // pred_region
      %14 = vsyncadd [#allocation3], 0
      %s15 = sshll.u32 %s1, 4
      %s16 = int_to_ptr.hbm [resolvable:$true] %s15
      %s17 = sshll.u32 [#allocation2], 4
      %s18 = int_to_ptr.vmem [resolvable:$true] %s17
      %23 = dma.hbm_to_vmem [thread:$0]  %s16, 4736, %s18, [#allocation3], 128, 128, 8
    $region9: #{tpu_custom_call.1} parent=1 // pred_fallthru
      _
    // Predicated region
    $region10: #{tpu_custom_call.1} parent=1 // pred_check
      _
    $region11: #{tpu_custom_call.1} parent=1 // pred_check_branch
      %25 = sbr.rel (0) target = $region13
    $region12: #{tpu_custom_call.1} parent=1 // pred_region
      %27 = dma.done [#allocation3], 4736
    $region13: #{tpu_custom_call.1} parent=1 // pred_fallthru
      _
    %v28 = vld [vmem:[%s0] sm:$0xff]
    %v29 = vld [vmem:[%s0 + $0x8] sm:$0xff]
    %v30 = vld [vmem:[#allocation2] sm:$0xff]
    %v31 = vld [vmem:[#allocation2 + $0x8] sm:$0x1]
    %v32 = vperm.slane %v31, 0
    %vm33 = vcmask 64512
    %v35 = vsel %vm33, %v28, 0
    %v38 = vsel %vm33, %v29, 0
    %40 = vmatpush.msra.mxu0 0.0
    %41 = vmatpush.msra.mxu0 0.0
    %42 = vmatpush.msra.mxu0 0.0
    %43 = vmatpush.msra.mxu0 0.0
    %44 = vmatpush.msra.mxu0 0.0
    %45 = vmatpush.msra.mxu0 0.0
    %46 = vmatpush.msra.mxu0 0.0
    %47 = vmatpush.msra.mxu0 0.0
    %48 = vmatpush.msra.mxu0 0.0
    %49 = vmatpush.msra.mxu0 0.0
    %50 = vmatpush.msra.mxu0 0.0
    %51 = vmatpush.msra.mxu0 0.0
    %52 = vmatpush.msra.mxu0 0.0
    %53 = vmatpush.msra.mxu0 0.0
    %54 = vmatpush.msra.mxu0 0.0
    %55 = vmatpush.msra.mxu0 %v30
    %56 = vmatmul.f32.gmra.mxu0 %v35
    %v57 = vpop.f32.mrf.mxu0
    %v58 = vadd.f32 %v32, %v57
    %59 = vmatmul.f32.gmra.mxu0 %v38
    %v60 = vpop.f32.mrf.mxu0
    %v61 = vadd.f32 %v32, %v60
    %62 = vdwg.mxu0
    %v63 = vtanh.pop %v58
    %v64 = vtanh.pop %v61
    %v65 = vld [vmem:[#allocation2 + $0x10] sm:$0xff]
    %v66 = vld [vmem:[#allocation2 + $0x18] sm:$0xff]
    %v67 = vld [vmem:[#allocation2 + $0x20] sm:$0xff]
    %v68 = vld [vmem:[#allocation2 + $0x28] sm:$0xff]
    %v69 = vld [vmem:[#allocation2 + $0x30] sm:$0xff]
    %v70 = vld [vmem:[#allocation2 + $0x38] sm:$0xff]
    %v71 = vld [vmem:[#allocation2 + $0x40] sm:$0xff]
    %v72 = vld [vmem:[#allocation2 + $0x48] sm:$0xff]
    %v73 = vld [vmem:[#allocation2 + $0x50] sm:$0xff]
    %v74 = vld [vmem:[#allocation2 + $0x58] sm:$0xff]
    %v75 = vld [vmem:[#allocation2 + $0x60] sm:$0xff]
    %v76 = vld [vmem:[#allocation2 + $0x68] sm:$0xff]
    %v77 = vld [vmem:[#allocation2 + $0x70] sm:$0xff]
    %v78 = vld [vmem:[#allocation2 + $0x78] sm:$0xff]
    %v79 = vld [vmem:[#allocation2 + $0x80] sm:$0xff]
    %v80 = vld [vmem:[#allocation2 + $0x88] sm:$0xff]
    %v81 = vld [vmem:[#allocation2 + $0x90] sm:$0x1]
    %v82 = vperm.slane %v81, 0
    %83 = vmatpush.msra.mxu0 %v80
    %84 = vmatpush.msra.mxu0 %v79
    %85 = vmatpush.msra.mxu0 %v78
    %86 = vmatpush.msra.mxu0 %v77
    %87 = vmatpush.msra.mxu0 %v76
    %88 = vmatpush.msra.mxu0 %v75
    %89 = vmatpush.msra.mxu0 %v74
    %90 = vmatpush.msra.mxu0 %v73
    %91 = vmatpush.msra.mxu0 %v72
    %92 = vmatpush.msra.mxu0 %v71
    %93 = vmatpush.msra.mxu0 %v70
    %94 = vmatpush.msra.mxu0 %v69
    %95 = vmatpush.msra.mxu0 %v68
    %96 = vmatpush.msra.mxu0 %v67
    %97 = vmatpush.msra.mxu0 %v66
    %98 = vmatpush.msra.mxu0 %v65
    %99 = vmatmul.f32.gmra.mxu0 %v63
    %v100 = vpop.f32.mrf.mxu0
    %v101 = vadd.f32 %v82, %v100
    %102 = vmatmul.f32.gmra.mxu0 %v64
    %v103 = vpop.f32.mrf.mxu0
    %v104 = vadd.f32 %v82, %v103
    %105 = vdwg.mxu0
    %v106 = vtanh.pop %v101
    %v107 = vtanh.pop %v104
    %v108 = vld [vmem:[#allocation2 + $0x98] sm:$0xff]
    %v109 = vld [vmem:[#allocation2 + $0xa0] sm:$0xff]
    %v110 = vld [vmem:[#allocation2 + $0xa8] sm:$0xff]
    %v111 = vld [vmem:[#allocation2 + $0xb0] sm:$0xff]
    %v112 = vld [vmem:[#allocation2 + $0xb8] sm:$0xff]
    %v113 = vld [vmem:[#allocation2 + $0xc0] sm:$0xff]
    %v114 = vld [vmem:[#allocation2 + $0xc8] sm:$0xff]
    %v115 = vld [vmem:[#allocation2 + $0xd0] sm:$0xff]
    %v116 = vld [vmem:[#allocation2 + $0xd8] sm:$0xff]
    %v117 = vld [vmem:[#allocation2 + $0xe0] sm:$0xff]
    %v118 = vld [vmem:[#allocation2 + $0xe8] sm:$0xff]
    %v119 = vld [vmem:[#allocation2 + $0xf0] sm:$0xff]
    %v120 = vld [vmem:[#allocation2 + $0xf8] sm:$0xff]
    %v121 = vld [vmem:[#allocation2 + $0x100] sm:$0xff]
    %v122 = vld [vmem:[#allocation2 + $0x108] sm:$0xff]
    %v123 = vld [vmem:[#allocation2 + $0x110] sm:$0xff]
    %v124 = vld [vmem:[#allocation2 + $0x118] sm:$0x1]
    %v125 = vperm.slane %v124, 0
    %126 = vmatpush.msra.mxu0 %v123
    %127 = vmatpush.msra.mxu0 %v122
    %128 = vmatpush.msra.mxu0 %v121
    %129 = vmatpush.msra.mxu0 %v120
    %130 = vmatpush.msra.mxu0 %v119
    %131 = vmatpush.msra.mxu0 %v118
    %132 = vmatpush.msra.mxu0 %v117
    %133 = vmatpush.msra.mxu0 %v116
    %134 = vmatpush.msra.mxu0 %v115
    %135 = vmatpush.msra.mxu0 %v114
    %136 = vmatpush.msra.mxu0 %v113
    %137 = vmatpush.msra.mxu0 %v112
    %138 = vmatpush.msra.mxu0 %v111
    %139 = vmatpush.msra.mxu0 %v110
    %140 = vmatpush.msra.mxu0 %v109
    %141 = vmatpush.msra.mxu0 %v108
    %142 = vmatmul.f32.gmra.mxu0 %v106
    %v143 = vpop.f32.mrf.mxu0
    %v144 = vadd.f32 %v125, %v143
    %145 = vmatmul.f32.gmra.mxu0 %v107
    %v146 = vpop.f32.mrf.mxu0
    %v147 = vadd.f32 %v125, %v146
    %148 = vdwg.mxu0
    %v149 = vld [vmem:[#allocation2 + $0x120] sm:$0x1]
    %v150 = vmax.f32 %v149, 0.0
    %v151 = vand.u32 2147483647, %v149
    %v152 = vsub.f32 0.0, %v151
    %v153 = vmul.f32 %v152, 1.442695
    %v154 = vpow.pop %v153
    %v155 = vadd.f32 %v154, 1.0
    %v156 = vlog2.pop %v155
    %v157 = vmul.f32 %v156, 0.6931472
    %v158 = vmul.f32 -0.5, %v154
    %v159 = vadd.f32 %v158, 1.0
    %v160 = vmul.f32 %v159, %v154
    %v161 = vand.u32 2147483647, %v154
    %vm162 = vcmp.lt.f32.partialorder %v161, 0.0004427343
    %v163 = vsel %vm162, %v160, %v157
    %v164 = vadd.f32 %v150, %v163
    %v165 = vlaneseq
    %v166 = vand.u32 %v165, 127
    %vm167 = vcmp.ge.s32.totalorder %v166, 5
    %vm168 = vcmp.lt.s32.totalorder %v166, 9
    %vm169 = vmand %vm167, %vm168
    %v170 = vperm.slane %v164, 0
    %v171 = vsel %vm169, %v170, %v144
    %v172 = vsel %vm169, %v170, %v147
    %173 = vst [vmem:[#allocation5] sm:$0xff] %v171
    %174 = vst [vmem:[#allocation5 + $0x8] sm:$0xff] %v172
    // Predicated region
    $region14: #{tpu_custom_call.1} parent=1 // pred_check
      _
    $region15: #{tpu_custom_call.1} parent=1 // pred_check_branch
      %176 = sbr.rel (0) target = $region17
    $region16: #{tpu_custom_call.1} parent=1 // pred_region
      %178 = vsyncadd [#allocation4], 0
      %s179 = sshll.u32 [#allocation5], 4
      %s180 = int_to_ptr.vmem [resolvable:$true] %s179
      %s181 = sshll.u32 %s2, 4
      %s182 = int_to_ptr.hbm [resolvable:$true] %s181
      %187 = dma.vmem_to_hbm [thread:$0]  %s180, 256, %s182, [#allocation4], 128, 128, 8
    $region17: #{tpu_custom_call.1} parent=1 // pred_fallthru
      _
    // Predicated region
    $region18: #{tpu_custom_call.1} parent=1 // pred_check
      _
    $region19: #{tpu_custom_call.1} parent=1 // pred_check_branch
      %189 = sbr.rel (0) target = $region21
    $region20: #{tpu_custom_call.1} parent=1 // pred_region
      %191 = dma.done [#allocation4], 256
    $region21: #{tpu_custom_call.1} parent=1 // pred_fallthru
      _
    %192 = vsyncpa [#allocation3], 1
    %193 = vsyncpa [#allocation4], 1

</llo_original>
